<compile_context>
chip_gen: v6e
topology: v6e:2x2x1
jax: 0.10.0
libtpu: 0.0.40
codegen_flags: <defaults>
</compile_context>

<pallas_src>
import functools

import jax
import jax.numpy as jnp
from jax import lax
from jax.experimental import pallas as pl
from jax.experimental.pallas import tpu as pltpu

LANES = 128
SUBLANES = 8
DEFAULT_BLOCK_ROWS = 2048  # 2048 x 128 f32 = 1 MiB per input per block


def _round_up(a, b):
    return ((a + b - 1) // b) * b


def _dice_partial_kernel(x_ref, y_ref, o_ref, *, logit, block_rows, full_rows, rem_lanes,
                         need_mask):
    """Per-block partial sums of p*q and p+q, reduced to two (8, 128) lane tiles."""
    a = x_ref[...].astype(jnp.float32)
    b = y_ref[...].astype(jnp.float32)
    if logit:
        # sigmoid(x) = 0.5 * tanh(x / 2) + 0.5  -> one EUP transcendental per element.
        a = 0.5 * jnp.tanh(0.5 * a) + 0.5
        b = 0.5 * jnp.tanh(0.5 * b) + 0.5

    prod = a * b
    psum = a + b

    if need_mask:
        # Neutralize the padded tail. Row-based compare (no flat-index multiply):
        # overflow-safe for huge tensors and one less int op; the lane compare is
        # only emitted when the element count is not a multiple of 128.
        row_ids = lax.broadcasted_iota(jnp.int32, (block_rows, LANES), 0)
        grow = pl.program_id(0) * block_rows + row_ids
        mask = grow < full_rows
        if rem_lanes:
            col_ids = lax.broadcasted_iota(jnp.int32, (block_rows, LANES), 1)
            mask = mask | ((grow == full_rows) & (col_ids < rem_lanes))
        prod = jnp.where(mask, prod, 0.0)
        psum = jnp.where(mask, psum, 0.0)

    # (block_rows, 128) -> (groups, 8, 128) -> (8, 128): pure VPU sublane-group adds;
    # no cross-lane / XLU reduction in the hot loop.
    groups = block_rows // SUBLANES
    o_ref[0, :SUBLANES, :] = jnp.sum(prod.reshape(groups, SUBLANES, LANES), axis=0)
    o_ref[0, SUBLANES:, :] = jnp.sum(psum.reshape(groups, SUBLANES, LANES), axis=0)


def dice_consist_loss(input1, input2, logit=True, block_rows=DEFAULT_BLOCK_ROWS):
    """Pallas TPU implementation of DiceConsistLoss.forward."""
    assert input1.shape == input2.shape, "inputs must have identical shapes"
    n_elems = int(input1.size)

    rows = pl.cdiv(n_elems, LANES)
    block_rows = min(block_rows, _round_up(rows, SUBLANES))
    padded_rows = _round_up(rows, block_rows)
    padded_elems = padded_rows * LANES
    need_mask = padded_elems != n_elems

    def to_tiles(x):
        # Keep original dtype (kernel casts per block); pad only when required
        # (reshape of a contiguous array is free, pad is a one-time copy).
        flat = jnp.reshape(x, (-1,))
        if need_mask:
            flat = jnp.pad(flat, (0, padded_elems - n_elems))
        return flat.reshape(padded_rows, LANES)

    x2d = to_tiles(input1)
    y2d = to_tiles(input2)
    num_blocks = padded_rows // block_rows

    kernel = functools.partial(
        _dice_partial_kernel,
        logit=logit,
        block_rows=block_rows,
        full_rows=n_elems // LANES,
        rem_lanes=n_elems % LANES,
        need_mask=need_mask,
    )

    itemsize = jnp.dtype(input1.dtype).itemsize
    cost = pl.CostEstimate(
        flops=8 * padded_elems,
        transcendentals=(2 * padded_elems) if logit else 0,
        bytes_accessed=2 * padded_elems * itemsize
        + num_blocks * 2 * SUBLANES * LANES * 4,
    )

    parts = pl.pallas_call(
        kernel,
        out_shape=jax.ShapeDtypeStruct((num_blocks, 2 * SUBLANES, LANES), jnp.float32),
        grid_spec=pltpu.PrefetchScalarGridSpec(
            num_scalar_prefetch=0,
            grid=(num_blocks,),
            in_specs=[
                pl.BlockSpec((block_rows, LANES), lambda i: (i, 0)),
                pl.BlockSpec((block_rows, LANES), lambda i: (i, 0)),
            ],
            out_specs=pl.BlockSpec((1, 2 * SUBLANES, LANES), lambda i: (i, 0, 0)),
        ),
        compiler_params=pltpu.CompilerParams(
            dimension_semantics=("parallel",),
        ),
        cost_estimate=cost,
    )(x2d, y2d)

    # Tiny final reduction + scalar combine (outside the kernel; negligible traffic).
    s_prod = jnp.sum(parts[:, :SUBLANES, :])
    s_sum = jnp.sum(parts[:, SUBLANES:, :])
    return 1.0 - (2.0 * s_prod + 0.1) / (s_sum + 0.1)


if __name__ == "__main__":
    key = jax.random.PRNGKey(0)
    k1, k2, k3, k4 = jax.random.split(key, 4)

    def ref_loss(a, b, logit=True):
        if logit:
            a = jax.nn.sigmoid(a)
            b = jax.nn.sigmoid(b)
        return 1.0 - (2.0 * jnp.sum(a * b) + 0.1) / (jnp.sum(a + b) + 0.1)

    # NCHW activations: batch=2, channels=4, 16x16 spatial.
    x1 = jax.random.normal(k1, (2, 4, 16, 16), dtype=jnp.float32)
    x2 = jax.random.normal(k2, (2, 4, 16, 16), dtype=jnp.float32)

    # logit=True path (default in the PyTorch module).
    loss = jax.block_until_ready(dice_consist_loss(x1, x2, logit=True))
    ref = ref_loss(x1, x2, logit=True)
    assert jnp.allclose(loss, ref, atol=1e-5, rtol=1e-4), (loss, ref)

    # logit=False path (inputs already probabilities).
    p1, p2 = jax.nn.sigmoid(x1), jax.nn.sigmoid(x2)
    loss2 = jax.block_until_ready(dice_consist_loss(p1, p2, logit=False))
    ref2 = ref_loss(p1, p2, logit=False)
    assert jnp.allclose(loss2, ref2, atol=1e-5, rtol=1e-4), (loss2, ref2)

    # Ragged size (not a multiple of 128) exercises pad + in-kernel tail mask.
    y1 = jax.random.normal(k3, (2, 3, 7, 5), dtype=jnp.float32)
    y2 = jax.random.normal(k4, (2, 3, 7, 5), dtype=jnp.float32)
    loss3 = jax.block_until_ready(dice_consist_loss(y1, y2, logit=True))
    ref3 = ref_loss(y1, y2, logit=True)
    assert jnp.allclose(loss3, ref3, atol=1e-5, rtol=1e-4), (loss3, ref3)

    print("KERNEL_OK")
</pallas_src>

<mosaic_0001>
module attributes {stable_mosaic.version = 11 : i64} {
  func.func @_dice_partial_kernel(%arg0: i32, %arg1: memref<16x128xf32, #tpu.memory_space<vmem>>, %arg2: memref<16x128xf32, #tpu.memory_space<vmem>>, %arg3: memref<1x16x128xf32, #tpu.memory_space<vmem>>) attributes {dimension_semantics = [#tpu.dimension_semantics<parallel>], iteration_bounds = array<i64: 1>, scalar_prefetch = 0 : i64, scratch_operands = 0 : i64, tpu.core_type = #tpu.core_type<tc>, window_params = [{transform_indices = @transform_0, window_bounds = array<i64: 16, 128>}, {transform_indices = @transform_1, window_bounds = array<i64: 16, 128>}, {transform_indices = @transform_2, window_bounds = array<i64: 1, 16, 128>}]} {
    %c0 = arith.constant 0 : index
    %c0_0 = arith.constant 0 : index
    %0 = vector.load %arg1[%c0, %c0_0] : memref<16x128xf32, #tpu.memory_space<vmem>>, vector<16x128xf32>
    %c0_1 = arith.constant 0 : index
    %c0_2 = arith.constant 0 : index
    %1 = vector.load %arg2[%c0_1, %c0_2] : memref<16x128xf32, #tpu.memory_space<vmem>>, vector<16x128xf32>
    %cst = arith.constant 5.000000e-01 : f32
    %2 = vector.broadcast %cst : f32 to vector<16x128xf32>
    %3 = arith.mulf %2, %0 : vector<16x128xf32>
    %4 = math.tanh %3 : vector<16x128xf32>
    %cst_3 = arith.constant 5.000000e-01 : f32
    %5 = vector.broadcast %cst_3 : f32 to vector<16x128xf32>
    %6 = arith.mulf %5, %4 : vector<16x128xf32>
    %cst_4 = arith.constant 5.000000e-01 : f32
    %7 = vector.broadcast %cst_4 : f32 to vector<16x128xf32>
    %8 = arith.addf %6, %7 : vector<16x128xf32>
    %cst_5 = arith.constant 5.000000e-01 : f32
    %9 = vector.broadcast %cst_5 : f32 to vector<16x128xf32>
    %10 = arith.mulf %9, %1 : vector<16x128xf32>
    %11 = math.tanh %10 : vector<16x128xf32>
    %cst_6 = arith.constant 5.000000e-01 : f32
    %12 = vector.broadcast %cst_6 : f32 to vector<16x128xf32>
    %13 = arith.mulf %12, %11 : vector<16x128xf32>
    %cst_7 = arith.constant 5.000000e-01 : f32
    %14 = vector.broadcast %cst_7 : f32 to vector<16x128xf32>
    %15 = arith.addf %13, %14 : vector<16x128xf32>
    %16 = arith.mulf %8, %15 : vector<16x128xf32>
    %17 = arith.addf %8, %15 : vector<16x128xf32>
    %18 = vector.shape_cast %16 : vector<16x128xf32> to vector<2x8x128xf32>
    %cst_8 = arith.constant dense<0.000000e+00> : vector<8x128xf32>
    %19 = vector.multi_reduction <add>, %18, %cst_8 [0] : vector<2x8x128xf32> to vector<8x128xf32>
    %c0_9 = arith.constant 0 : index
    %c0_10 = arith.constant 0 : index
    %c0_11 = arith.constant 0 : index
    %20 = vector.load %arg3[%c0_9, %c0_10, %c0_11] : memref<1x16x128xf32, #tpu.memory_space<vmem>>, vector<1x8x128xf32>
    %21 = vector.shape_cast %20 : vector<1x8x128xf32> to vector<8x128xf32>
    %22 = vector.shape_cast %19 : vector<8x128xf32> to vector<1x8x128xf32>
    tpu.vector_store %arg3[%c0_9, %c0_10, %c0_11], %22 {strides = array<i32>} : memref<1x16x128xf32, #tpu.memory_space<vmem>>, vector<1x8x128xf32>,
    %23 = vector.shape_cast %17 : vector<16x128xf32> to vector<2x8x128xf32>
    %cst_12 = arith.constant dense<0.000000e+00> : vector<8x128xf32>
    %24 = vector.multi_reduction <add>, %23, %cst_12 [0] : vector<2x8x128xf32> to vector<8x128xf32>
    %c0_13 = arith.constant 0 : index
    %c8 = arith.constant 8 : index
    %c0_14 = arith.constant 0 : index
    %25 = vector.load %arg3[%c0_13, %c8, %c0_14] : memref<1x16x128xf32, #tpu.memory_space<vmem>>, vector<1x8x128xf32>
    %26 = vector.shape_cast %25 : vector<1x8x128xf32> to vector<8x128xf32>
    %27 = vector.shape_cast %24 : vector<8x128xf32> to vector<1x8x128xf32>
    tpu.vector_store %arg3[%c0_13, %c8, %c0_14], %27 {strides = array<i32>} : memref<1x16x128xf32, #tpu.memory_space<vmem>>, vector<1x8x128xf32>,
    return
  }
  func.func @transform_0(%arg0: i32) -> (i32, i32) {
    %c0_i32 = arith.constant 0 : i32
    %c0_i32_0 = arith.constant 0 : i32
    return %arg0, %c0_i32 : i32, i32
  }
  func.func @transform_1(%arg0: i32) -> (i32, i32) {
    %c0_i32 = arith.constant 0 : i32
    %c0_i32_0 = arith.constant 0 : i32
    return %arg0, %c0_i32 : i32, i32
  }
  func.func @transform_2(%arg0: i32) -> (i32, i32, i32) {
    %c0_i32 = arith.constant 0 : i32
    %c0_i32_0 = arith.constant 0 : i32
    %c0_i32_1 = arith.constant 0 : i32
    return %arg0, %c0_i32, %c0_i32_0 : i32, i32, i32
  }
}

</mosaic_0001>

<llo_original>
// kernel: tpu_custom_call.1
$region0: #{tpu_custom_call.1}
  #allocation0 [shape = 'u32[]', space=smem, size = 0x4, offset = 0x4, fixed_abs, tag = 'smem constant byte address 0x4 - core index']
  #allocation1 [shape = 'u32[144,128]{1,0:T(1,128)}', space=vmem, size = 0x12000, scoped, tag = 'internal scratch']
  %s0 = inlined_call_operand.hbm [shape: f32[16,128], index: 0, kind: input, shape index: {}]
  %s1 = inlined_call_operand.hbm [shape: f32[16,128], index: 1, kind: input, shape index: {}]
  %s2 = inlined_call_operand.hbm [shape: f32[1,16,128], index: 2, kind: output, shape index: {}]
  %s3 = sld [smem:[#allocation0]]
  $region26: #{tpu_custom_call.1} parent=0
    _
  %s5 = ssub.s32 1, %s3
  %s6 = scalar_select 0, %s5, %s3
  $region1: #{tpu_custom_call.1} parent=0
    #allocation2 [shape = 'u8[8192]{0}', space=vmem, size = 0x2000, scoped, tag = 'input window, operand 0, single buffered']
    #allocation3 [shape = 's32[1]{0}', space=sflag, size = 0x4, scoped, tag = 'scoped memory for tpu_custom_call.1']
    #allocation4 [shape = 's32[1]{0}', space=sflag, size = 0x4, scoped, tag = 'scoped memory for tpu_custom_call.1']
    #allocation5 [shape = 'u8[8192]{0}', space=vmem, size = 0x2000, scoped, tag = 'input window, operand 1, single buffered']
    #allocation6 [shape = 's32[1]{0}', space=sflag, size = 0x4, scoped, tag = 'scoped memory for tpu_custom_call.1']
    #allocation7 [shape = 'u8[8192]{0}', space=vmem, size = 0x2000, scoped, tag = 'output window, operand 0, single buffered']
    %7 = vsyncpa [#allocation3], 0
    %8 = vsyncpa [#allocation6], 0
    %9 = vsyncpa [#allocation4], 0
    // Predicated region
    $region2: #{tpu_custom_call.1} parent=1 // pred_check
      _
    $region3: #{tpu_custom_call.1} parent=1 // pred_check_branch
      %11 = sbr.rel (0) target = $region5
    $region4: #{tpu_custom_call.1} parent=1 // pred_region
      %s13 = ssub.s32 256, 256
      %14 = vsyncadd [#allocation3], %s13
      %s15 = sshll.u32 [#allocation2], 4
      %s16 = int_to_ptr.vmem [resolvable:$true] %s15
      %21 = dma.hbm_to_vmem [thread:$0]  %s0, 256, %s16, [#allocation3], 128, 128, 8
    $region5: #{tpu_custom_call.1} parent=1 // pred_fallthru
      _
    // Predicated region
    $region6: #{tpu_custom_call.1} parent=1 // pred_check
      _
    $region7: #{tpu_custom_call.1} parent=1 // pred_check_branch
      %23 = sbr.rel (0) target = $region9
    $region8: #{tpu_custom_call.1} parent=1 // pred_region
      %s25 = ssub.s32 256, 256
      %26 = vsyncadd [#allocation6], %s25
      %s27 = sshll.u32 [#allocation5], 4
      %s28 = int_to_ptr.vmem [resolvable:$true] %s27
      %33 = dma.hbm_to_vmem [thread:$0]  %s1, 256, %s28, [#allocation6], 128, 128, 8
    $region9: #{tpu_custom_call.1} parent=1 // pred_fallthru
      _
    // Predicated region
    $region10: #{tpu_custom_call.1} parent=1 // pred_check
      _
    $region11: #{tpu_custom_call.1} parent=1 // pred_check_branch
      %35 = sbr.rel (0) target = $region13
    $region12: #{tpu_custom_call.1} parent=1 // pred_region
      %36 = dma.done [#allocation3], 256
    $region13: #{tpu_custom_call.1} parent=1 // pred_fallthru
      _
    // Predicated region
    $region14: #{tpu_custom_call.1} parent=1 // pred_check
      _
    $region15: #{tpu_custom_call.1} parent=1 // pred_check_branch
      %38 = sbr.rel (0) target = $region17
    $region16: #{tpu_custom_call.1} parent=1 // pred_region
      %39 = dma.done [#allocation6], 256
    $region17: #{tpu_custom_call.1} parent=1 // pred_fallthru
      _
    %v40 = vld [vmem:[#allocation2] sm:$0xff]
    %v41 = vld [vmem:[#allocation2 + $0x8] sm:$0xff]
    %v42 = vld [vmem:[#allocation5] sm:$0xff]
    %v43 = vld [vmem:[#allocation5 + $0x8] sm:$0xff]
    %v44 = vmul.f32 %v40, 0.5
    %v45 = vmul.f32 %v41, 0.5
    %v46 = vtanh.pop %v44
    %v47 = vtanh.pop %v45
    %v48 = vmul.f32 %v46, 0.5
    %v49 = vmul.f32 %v47, 0.5
    %v50 = vadd.f32 %v48, 0.5
    %v51 = vadd.f32 %v49, 0.5
    %v52 = vmul.f32 %v42, 0.5
    %v53 = vmul.f32 %v43, 0.5
    %v54 = vtanh.pop %v52
    %v55 = vtanh.pop %v53
    %v56 = vmul.f32 %v54, 0.5
    %v57 = vmul.f32 %v55, 0.5
    %v58 = vadd.f32 %v56, 0.5
    %v59 = vadd.f32 %v57, 0.5
    %v60 = vmul.f32 %v50, %v58
    %v61 = vmul.f32 %v51, %v59
    %v62 = vadd.f32 %v50, %v58
    %v63 = vadd.f32 %v51, %v59
    %v64 = vadd.f32 %v60, %v61
    %65 = vst [vmem:[#allocation7] sm:$0xff] %v64
    %v66 = vadd.f32 %v62, %v63
    %67 = vst [vmem:[#allocation7 + $0x8] sm:$0xff] %v66
    // Predicated region
    $region18: #{tpu_custom_call.1} parent=1 // pred_check
      _
    $region19: #{tpu_custom_call.1} parent=1 // pred_check_branch
      %69 = sbr.rel (0) target = $region21
    $region20: #{tpu_custom_call.1} parent=1 // pred_region
      %s71 = ssub.s32 256, 256
      %72 = vsyncadd [#allocation4], %s71
      %s73 = sshll.u32 [#allocation7], 4
      %s74 = int_to_ptr.vmem [resolvable:$true] %s73
      %79 = dma.vmem_to_hbm [thread:$0]  %s74, 256, %s2, [#allocation4], 128, 128, 8
    $region21: #{tpu_custom_call.1} parent=1 // pred_fallthru
      _
    // Predicated region
    $region22: #{tpu_custom_call.1} parent=1 // pred_check
      _
    $region23: #{tpu_custom_call.1} parent=1 // pred_check_branch
      %81 = sbr.rel (0) target = $region25
    $region24: #{tpu_custom_call.1} parent=1 // pred_region
      %82 = dma.done [#allocation4], 256
    $region25: #{tpu_custom_call.1} parent=1 // pred_fallthru
      _
    %83 = vsyncpa [#allocation3], 1
    %84 = vsyncpa [#allocation6], 1
    %85 = vsyncpa [#allocation4], 1

</llo_original>
